<compile_context>
chip_gen: v5e
topology: v5e:2x2
jax: 0.10.0
libtpu: 0.0.40
codegen_flags: <defaults>
</compile_context>

<pallas_src>
import jax
import jax.numpy as jnp
from jax import lax
from jax.experimental import pallas as pl
from jax.experimental.pallas import tpu as pltpu


def cpn_kernel(x_ref, wk_ref, wg_ref, o_ref):
    x = x_ref[...].astype(jnp.float32)            # (TB, in)

    # Row-wise L2 normalization: rsqrt (EUP) + vmul instead of sqrt + divide.
    inv_norm = lax.rsqrt(jnp.sum(x * x, axis=1, keepdims=True))
    xn = x * inv_norm

    # Kohonen layer: (TB, in) x (hidden, in) contracting on last dims
    # (== xn @ Wk^T) — single MXU matmul, no materialized transpose.
    wk = wk_ref[...].astype(jnp.float32)          # (hidden, in)
    k = lax.dot_general(xn, wk, (((1,), (1,)), ((), ())),
                        preferred_element_type=jnp.float32)   # (TB, hidden)

    # Winner-take-all: one-hot of the argmax along axis 1 with first-occurrence
    # tie-breaking (matches torch.max). max/min reductions land on the XLU.
    kmax = jnp.max(k, axis=1, keepdims=True)
    col = lax.broadcasted_iota(jnp.int32, k.shape, 1)
    masked_cols = jnp.where(k == kmax, col, jnp.int32(k.shape[1]))
    win_idx = jnp.min(masked_cols, axis=1, keepdims=True)
    one_hot = (col == win_idx).astype(jnp.float32)            # (TB, hidden)

    # Grossberg layer: (TB, hidden) x (classes, hidden) contracting last dims
    # (== one_hot @ Wg^T). The one-hot matmul is the TPU-friendly row gather.
    wg = wg_ref[...].astype(jnp.float32)          # (classes, hidden)
    out = lax.dot_general(one_hot, wg, (((1,), (1,)), ((), ())),
                          preferred_element_type=jnp.float32)
    o_ref[...] = out.astype(o_ref.dtype)


def counter_propagation_forward(x, wk, wg, *, block_b=256):
    """x: (B, input_size); wk: (hidden, input_size); wg: (num_classes, hidden)."""
    B, input_size = x.shape
    hidden_size, wk_in = wk.shape
    num_classes, wg_hidden = wg.shape
    assert wk_in == input_size and wg_hidden == hidden_size

    # Batch tile: multiple of 8 sublanes, capped at block_b. 256 fills the
    # MXU M dimension and keeps double-buffered x tiles + resident weights
    # comfortably under the default scoped-VMEM limit for these layer sizes.
    tb = min(block_b, ((B + 7) // 8) * 8)
    tb = max(8, ((tb + 7) // 8) * 8)
    b_pad = pl.cdiv(B, tb) * tb
    if b_pad != B:
        # Zero pad rows: zero norm -> NaN scores -> all-zero one-hot -> zero
        # output rows, sliced off below.
        x = jnp.pad(x, ((0, b_pad - B), (0, 0)))

    cost = pl.CostEstimate(
        flops=2 * B * input_size * hidden_size
              + 2 * B * hidden_size * num_classes,
        transcendentals=B,  # one rsqrt per row
        bytes_accessed=4 * (B * input_size + hidden_size * input_size
                            + num_classes * hidden_size + B * num_classes),
    )

    out = pl.pallas_call(
        cpn_kernel,
        out_shape=jax.ShapeDtypeStruct((b_pad, num_classes), jnp.float32),
        grid=(b_pad // tb,),
        in_specs=[
            # x: tiled along batch, auto double-buffered by the pipeline.
            pl.BlockSpec((tb, input_size), lambda i: (i, 0)),
            # Weights: same block for every grid step -> VMEM-resident.
            pl.BlockSpec((hidden_size, input_size), lambda i: (0, 0)),
            pl.BlockSpec((num_classes, hidden_size), lambda i: (0, 0)),
        ],
        out_specs=pl.BlockSpec((tb, num_classes), lambda i: (i, 0)),
        compiler_params=pltpu.CompilerParams(
            dimension_semantics=("parallel",)),   # shards over 2 TCs on v7x
        cost_estimate=cost,
    )(x, wk, wg)

    return out[:B] if b_pad != B else out


def _reference(x, wk, wg, hidden_size):
    xn = x / jnp.linalg.norm(x, axis=1, keepdims=True)
    k = xn @ wk.T
    one_hot = jax.nn.one_hot(jnp.argmax(k, axis=1), hidden_size,
                             dtype=jnp.float32)
    return one_hot @ wg.T


if __name__ == "__main__":
    # Small shapes consistent with the module's forward.
    B, input_size, hidden_size, num_classes = 8, 16, 32, 8

    key = jax.random.PRNGKey(0)
    kx, kk, kg, kx2 = jax.random.split(key, 4)

    x = jax.random.normal(kx, (B, input_size), dtype=jnp.float32)
    # nn.init.uniform_(w, -1, 1) for both layers (deterministic in-script init).
    wk = jax.random.uniform(kk, (hidden_size, input_size), dtype=jnp.float32,
                            minval=-1.0, maxval=1.0)
    wg = jax.random.uniform(kg, (num_classes, hidden_size), dtype=jnp.float32,
                            minval=-1.0, maxval=1.0)

    out = counter_propagation_forward(x, wk, wg)
    out = jax.block_until_ready(out)

    ref = _reference(x, wk, wg, hidden_size)
    assert out.shape == (B, num_classes)
    assert jnp.allclose(out, ref, atol=1e-5, rtol=1e-5)

    # Exercise the multi-block grid + batch-padding path with a non-aligned B.
    B2 = 40
    x2 = jax.random.normal(kx2, (B2, input_size), dtype=jnp.float32)
    out2 = jax.block_until_ready(
        counter_propagation_forward(x2, wk, wg, block_b=16))
    ref2 = _reference(x2, wk, wg, hidden_size)
    assert out2.shape == (B2, num_classes)
    assert jnp.allclose(out2, ref2, atol=1e-5, rtol=1e-5)

    print("KERNEL_OK")
</pallas_src>

<mosaic_0001>
module attributes {stable_mosaic.version = 11 : i64} {
  func.func @cpn_kernel(%arg0: i32, %arg1: memref<8x16xf32, #tpu.memory_space<vmem>>, %arg2: memref<32x16xf32, #tpu.memory_space<vmem>>, %arg3: memref<8x32xf32, #tpu.memory_space<vmem>>, %arg4: memref<8x8xf32, #tpu.memory_space<vmem>>) attributes {dimension_semantics = [#tpu.dimension_semantics<parallel>], iteration_bounds = array<i64: 1>, scalar_prefetch = 0 : i64, scratch_operands = 0 : i64, tpu.core_type = #tpu.core_type<tc>, window_params = [{transform_indices = @transform_0, window_bounds = array<i64: 8, 16>}, {pipeline_mode = #tpu.pipeline_mode<synchronous>, transform_indices = @transform_1, window_bounds = array<i64: 32, 16>}, {pipeline_mode = #tpu.pipeline_mode<synchronous>, transform_indices = @transform_2, window_bounds = array<i64: 8, 32>}, {transform_indices = @transform_3, window_bounds = array<i64: 8, 8>}]} {
    %c0 = arith.constant 0 : index
    %c0_0 = arith.constant 0 : index
    %0 = vector.load %arg1[%c0, %c0_0] : memref<8x16xf32, #tpu.memory_space<vmem>>, vector<8x16xf32>
    %1 = arith.mulf %0, %0 : vector<8x16xf32>
    %cst = arith.constant dense<0.000000e+00> : vector<8xf32>
    %2 = vector.multi_reduction <add>, %1, %cst [1] : vector<8x16xf32> to vector<8xf32>
    %3 = vector.shape_cast %2 : vector<8xf32> to vector<8x1xf32>
    %4 = math.rsqrt %3 : vector<8x1xf32>
    %5 = vector.broadcast %4 : vector<8x1xf32> to vector<8x16xf32>
    %6 = arith.mulf %0, %5 : vector<8x16xf32>
    %c0_1 = arith.constant 0 : index
    %c0_2 = arith.constant 0 : index
    %7 = vector.load %arg2[%c0_1, %c0_2] : memref<32x16xf32, #tpu.memory_space<vmem>>, vector<32x16xf32>
    %cst_3 = arith.constant dense<0.000000e+00> : vector<8x32xf32>
    %8 = tpu.matmul %6, %7, %cst_3 {dimension_numbers = #tpu.dot_dimension_numbers<[1], [1], [0], [0], [0, 0, 1, 0], [], []>} : vector<8x16xf32>, vector<32x16xf32>, vector<8x32xf32> -> vector<8x32xf32>
    %cst_4 = arith.constant dense<0xFF800000> : vector<8xf32>
    %9 = vector.multi_reduction <maximumf>, %8, %cst_4 [1] : vector<8x32xf32> to vector<8xf32>
    %10 = vector.shape_cast %9 : vector<8xf32> to vector<8x1xf32>
    %11 = tpu.iota {dimensions = array<i32: 1>} : vector<8x32xi32>
    %12 = vector.broadcast %10 : vector<8x1xf32> to vector<8x32xf32>
    %13 = arith.cmpf oeq, %8, %12 : vector<8x32xf32>
    %c32_i32 = arith.constant 32 : i32
    %14 = vector.broadcast %c32_i32 : i32 to vector<8x32xi32>
    %15 = arith.select %13, %11, %14 : vector<8x32xi1>, vector<8x32xi32>
    %cst_5 = arith.constant dense<2147483647> : vector<8xi32>
    %16 = vector.multi_reduction <minsi>, %15, %cst_5 [1] : vector<8x32xi32> to vector<8xi32>
    %17 = vector.shape_cast %16 : vector<8xi32> to vector<8x1xi32>
    %18 = vector.broadcast %17 : vector<8x1xi32> to vector<8x32xi32>
    %19 = arith.cmpi eq, %11, %18 : vector<8x32xi32>
    %20 = arith.extui %19 : vector<8x32xi1> to vector<8x32xi32>
    %21 = arith.sitofp %20 : vector<8x32xi32> to vector<8x32xf32>
    %c0_6 = arith.constant 0 : index
    %c0_7 = arith.constant 0 : index
    %22 = vector.load %arg3[%c0_6, %c0_7] : memref<8x32xf32, #tpu.memory_space<vmem>>, vector<8x32xf32>
    %cst_8 = arith.constant dense<0.000000e+00> : vector<8x8xf32>
    %23 = tpu.matmul %21, %22, %cst_8 {dimension_numbers = #tpu.dot_dimension_numbers<[1], [1], [0], [0], [0, 0, 1, 0], [], []>} : vector<8x32xf32>, vector<8x32xf32>, vector<8x8xf32> -> vector<8x8xf32>
    %c0_9 = arith.constant 0 : index
    %c0_10 = arith.constant 0 : index
    %24 = vector.load %arg4[%c0_9, %c0_10] : memref<8x8xf32, #tpu.memory_space<vmem>>, vector<8x8xf32>
    tpu.vector_store %arg4[%c0_9, %c0_10], %23 {strides = array<i32>} : memref<8x8xf32, #tpu.memory_space<vmem>>, vector<8x8xf32>,
    return
  }
  func.func @transform_0(%arg0: i32) -> (i32, i32) {
    %c0_i32 = arith.constant 0 : i32
    %c0_i32_0 = arith.constant 0 : i32
    return %arg0, %c0_i32 : i32, i32
  }
  func.func @transform_1(%arg0: i32) -> (i32, i32) {
    %c0_i32 = arith.constant 0 : i32
    %c0_i32_0 = arith.constant 0 : i32
    %c0_i32_1 = arith.constant 0 : i32
    return %c0_i32, %c0_i32_0 : i32, i32
  }
  func.func @transform_2(%arg0: i32) -> (i32, i32) {
    %c0_i32 = arith.constant 0 : i32
    %c0_i32_0 = arith.constant 0 : i32
    %c0_i32_1 = arith.constant 0 : i32
    return %c0_i32, %c0_i32_0 : i32, i32
  }
  func.func @transform_3(%arg0: i32) -> (i32, i32) {
    %c0_i32 = arith.constant 0 : i32
    %c0_i32_0 = arith.constant 0 : i32
    return %arg0, %c0_i32 : i32, i32
  }
}

</mosaic_0001>

<llo_original>
// kernel: tpu_custom_call.1
$region0: #{tpu_custom_call.1}
  #allocation0 [shape = 'u32[]', space=smem, size = 0x4, offset = 0x4, fixed_abs, tag = 'smem constant byte address 0x4 - core index']
  #allocation1 [shape = 'u32[72,128]{1,0:T(1,128)}', space=vmem, size = 0x9000, scoped, tag = 'internal scratch']
  %s0 = inlined_call_operand.vmem [shape: f32[8,16], index: 0, kind: input, shape index: {}]
  %s1 = inlined_call_operand.vmem [shape: f32[32,16], index: 1, kind: input, shape index: {}]
  %s2 = inlined_call_operand.vmem [shape: f32[8,32], index: 2, kind: input, shape index: {}]
  %s3 = inlined_call_operand.hbm [shape: f32[8,8], index: 3, kind: output, shape index: {}]
  %s4 = sld [smem:[#allocation0]]
  $region22: #{tpu_custom_call.1} parent=0
    _
  %s6 = ssub.s32 1, %s4
  %s7 = scalar_select 0, %s6, %s4
  $region1: #{tpu_custom_call.1} parent=0
    #allocation2 [shape = 'u8[4096]{0}', space=vmem, size = 0x1000, scoped, tag = 'output window, operand 0, single buffered']
    #allocation3 [shape = 's32[1]{0}', space=sflag, size = 0x4, scoped, tag = 'scoped memory for tpu_custom_call.1']
    %8 = vsyncpa [#allocation3], 0
    // Predicated region
    $region2: #{tpu_custom_call.1} parent=1 // pred_check
      _
    $region3: #{tpu_custom_call.1} parent=1 // pred_check_branch
      %10 = sbr.rel (0) target = $region5
    $region4: #{tpu_custom_call.1} parent=1 // pred_region
      _
    $region5: #{tpu_custom_call.1} parent=1 // pred_fallthru
      _
    // Predicated region
    $region6: #{tpu_custom_call.1} parent=1 // pred_check
      _
    $region7: #{tpu_custom_call.1} parent=1 // pred_check_branch
      %12 = sbr.rel (0) target = $region9
    $region8: #{tpu_custom_call.1} parent=1 // pred_region
      _
    $region9: #{tpu_custom_call.1} parent=1 // pred_fallthru
      _
    // Predicated region
    $region10: #{tpu_custom_call.1} parent=1 // pred_check
      _
    $region11: #{tpu_custom_call.1} parent=1 // pred_check_branch
      %14 = sbr.rel (0) target = $region13
    $region12: #{tpu_custom_call.1} parent=1 // pred_region
      _
    $region13: #{tpu_custom_call.1} parent=1 // pred_fallthru
      _
    %v15 = vld [vmem:[%s0] sm:$0xff]
    %v16 = vmul.f32 %v15, %v15
    %vm17 = vcmask 130048
    %v18 = vsel %vm17, %v16, 0.0
    %19 = vadd.xlane.f32.xlu0 %v18
    %v20 = vpop.xlane.xlu0 %19
    %v21 = vrsqrt.pop %v20
    %v22 = vmul.f32 %v21, %v20
    %v23 = vmul.f32 %v22, %v21
    %v24 = vmul.f32 0.5, %v23
    %v25 = vsub.f32 1.5, %v24
    %v26 = vmul.f32 %v21, %v25
    %vm27 = vweird.f32 %v20
    %vm28 = vweird.f32 %v21
    %vm29 = vmor %vm27, %vm28
    %v30 = vsel %vm29, %v21, %v26
    %v31 = vmul.f32 %v15, %v30
    %v32 = vld [vmem:[%s1] sm:$0xff]
    %v33 = vld [vmem:[%s1 + $0x8] sm:$0xff]
    %v34 = vld [vmem:[%s1 + $0x10] sm:$0xff]
    %v35 = vld [vmem:[%s1 + $0x18] sm:$0xff]
    %v37 = vsel %vm17, %v31, 0
    %v40 = vsel %vm17, %v32, 0
    %v43 = vsel %vm17, %v33, 0
    %v46 = vsel %vm17, %v34, 0
    %v49 = vsel %vm17, %v35, 0
    %51 = vmatpush.xpose.msra.mxu0 0.0
    %52 = vmatpush.xpose.msra.mxu0 0.0
    %53 = vmatpush.xpose.msra.mxu0 0.0
    %54 = vmatpush.xpose.msra.mxu0 0.0
    %55 = vmatpush.xpose.msra.mxu0 0.0
    %56 = vmatpush.xpose.msra.mxu0 0.0
    %57 = vmatpush.xpose.msra.mxu0 0.0
    %58 = vmatpush.xpose.msra.mxu0 0.0
    %59 = vmatpush.xpose.msra.mxu0 0.0
    %60 = vmatpush.xpose.msra.mxu0 0.0
    %61 = vmatpush.xpose.msra.mxu0 0.0
    %62 = vmatpush.xpose.msra.mxu0 0.0
    %63 = vmatpush.xpose.msra.mxu0 %v49
    %64 = vmatpush.xpose.msra.mxu0 %v46
    %65 = vmatpush.xpose.msra.mxu0 %v43
    %66 = vmatpush.xpose.msra.mxu0 %v40
    %67 = vmatmul.f32.gmra.mxu0 %v37
    %v68 = vpop.f32.mrf.mxu0
    %v69 = vadd.f32 0.0, %v68
    %70 = vdwg.mxu0
    %vm71 = vcmask 261120
    %v72 = vsel %vm71, %v69, -inf
    %73 = vmax.xlane.f32.xlu0 %v72
    %v74 = vpop.xlane.xlu0 %73
    %v75 = vlaneseq
    %v76 = vand.u32 %v75, 127
    %vm77 = vcmp.eq.f32.partialorder %v69, %v74
    %v78 = vsel %vm77, %v76, 32
    %v79 = vsel %vm71, %v78, 2147483647
    %v80 = vand.u32 %v79, 65535
    %v81 = vshra.s32 %v79, 16
    %v82 = vcvt.s32.f32 %v80
    %v83 = vcvt.s32.f32 %v81
    %84 = vmin.xlane.f32.xlu0 %v83
    %v85 = vpop.xlane.xlu0 %84
    %vm86 = vcmp.eq.f32.partialorder %v83, %v85
    %v87 = vsel %vm86, %v82, inf
    %88 = vmin.xlane.f32.xlu0 %v87
    %v89 = vpop.xlane.xlu0 %88
    %v90 = vcvt.f32.s32 %v89
    %v91 = vcvt.f32.s32 %v85
    %v92 = vshll.u32 %v91, 16
    %v93 = vadd.s32 %v92, %v90
    %vm94 = vcmp.eq.s32.totalorder %v76, %v93
    %v95 = vsel %vm94, 1, 0
    %v96 = vcvt.s32.f32 %v95
    %v97 = vld [vmem:[%s2] sm:$0xff]
    %v99 = vsel %vm71, %v96, 0
    %v102 = vsel %vm71, %v97, 0
    %104 = vmatpush.xpose.msra.mxu0 0.0
    %105 = vmatpush.xpose.msra.mxu0 0.0
    %106 = vmatpush.xpose.msra.mxu0 0.0
    %107 = vmatpush.xpose.msra.mxu0 0.0
    %108 = vmatpush.xpose.msra.mxu0 0.0
    %109 = vmatpush.xpose.msra.mxu0 0.0
    %110 = vmatpush.xpose.msra.mxu0 0.0
    %111 = vmatpush.xpose.msra.mxu0 0.0
    %112 = vmatpush.xpose.msra.mxu0 0.0
    %113 = vmatpush.xpose.msra.mxu0 0.0
    %114 = vmatpush.xpose.msra.mxu0 0.0
    %115 = vmatpush.xpose.msra.mxu0 0.0
    %116 = vmatpush.xpose.msra.mxu0 0.0
    %117 = vmatpush.xpose.msra.mxu0 0.0
    %118 = vmatpush.xpose.msra.mxu0 0.0
    %119 = vmatpush.xpose.msra.mxu0 %v102
    %120 = vmatmul.f32.gmra.mxu0 %v99
    %v121 = vpop.f32.mrf.mxu0
    %v122 = vadd.f32 0.0, %v121
    %123 = vdwg.mxu0
    %vm124 = vcmask 64512
    %125 = vst.msk [vmem:[#allocation2] sm:$0xff] %vm124, %v122
    // Predicated region
    $region14: #{tpu_custom_call.1} parent=1 // pred_check
      _
    $region15: #{tpu_custom_call.1} parent=1 // pred_check_branch
      %127 = sbr.rel (0) target = $region17
    $region16: #{tpu_custom_call.1} parent=1 // pred_region
      %129 = vsyncadd [#allocation3], 0
      %s131 = sshll.u32 [#allocation2], 4
      %s132 = int_to_ptr.vmem [resolvable:$true] %s131
      %s133 = sshll.u32 %s3, 4
      %s134 = int_to_ptr.hbm [resolvable:$true] %s133
      %136 = dma.vmem_to_hbm [thread:$0]  %s132, 128, %s134, [#allocation3]
    $region17: #{tpu_custom_call.1} parent=1 // pred_fallthru
      _
    // Predicated region
    $region18: #{tpu_custom_call.1} parent=1 // pred_check
      _
    $region19: #{tpu_custom_call.1} parent=1 // pred_check_branch
      %138 = sbr.rel (0) target = $region21
    $region20: #{tpu_custom_call.1} parent=1 // pred_region
      %140 = dma.done [#allocation3], 128
    $region21: #{tpu_custom_call.1} parent=1 // pred_fallthru
      _
    %141 = vsyncpa [#allocation3], 1

</llo_original>
